<compile_context>
chip_gen: v7x
topology: tpu7x:2x2x1
jax: 0.10.0
libtpu: 0.0.40
codegen_flags: <defaults>
</compile_context>

<pallas_src>
import math

import jax
import jax.numpy as jnp
import numpy as np
from jax.experimental import pallas as pl
from jax.experimental.pallas import tpu as pltpu

# Module hyper-parameters (from __init__ defaults).
S = 7
B = 2
C = 20
LAMBDA_COORD = 5.0
LAMBDA_NOOBJ = 0.5
D = C + 5 * B  # 30 channels per grid cell

_SINGLE_BLOCK_MAX_ROWS = 2048   # below this, one full-extent block is cheapest
_MAX_TILE_ROWS = 8192           # 2 inputs x 2 buffers x 8192x128x4B = 32 MiB padded VMEM


def _round_up(x, m):
    return ((x + m - 1) // m) * m


def _make_kernel(tile, num_tiles, rows, need_row_mask):
    """Builds the kernel with all grid/tiling facts baked in as constants."""
    last_step = num_tiles - 1
    use_acc = (tile % 8 == 0)   # reshape-based VPU partial reduction path

    def kernel(preds_ref, targets_ref, out_ref, acc_ref):
        step = pl.program_id(0)

        if use_acc:
            @pl.when(step == 0)
            def _():
                acc_ref[...] = jnp.zeros_like(acc_ref)

        # Upcast in-register (inputs may be bf16; no wrapper-side cast copy).
        p = preds_ref[...].astype(jnp.float32)    # (tile, D)
        t = targets_ref[...].astype(jnp.float32)

        # Column masks, built on a single (1, D) vector per step (D < 128, so
        # one vreg's worth of lanes; negligible cost).
        col = jax.lax.broadcasted_iota(jnp.int32, (1, D), 1)
        off = col % 5                              # offset within a box slot
        in_box = col < 5 * B                       # box slots occupy [0, 5B)
        is_coord = in_box & (off < 4)              # x, y, w, h columns
        is_wh = in_box & (off >= 2) & (off < 4)    # w, h columns -> sqrt term

        # Per-cell object mask; fold in the row-validity mask only when the
        # last block is actually partial (Python-static decision).
        obj = t[:, 4:5] > 0.0                      # (tile, 1)
        if need_row_mask:
            row = jax.lax.broadcasted_iota(jnp.int32, (tile, 1), 0) + step * tile
            obj = obj & (row < rows)

        # sqrt identity: (sqrt(p)-sqrt(t))^2 == p + t - 2*sqrt(p*t); one EUP
        # sqrt instead of two. NaNs from negative w/h in no-object cells or
        # from unspecified tail-row contents are discarded by the final select.
        diff = p - t
        sq_xy = diff * diff
        root = jnp.sqrt(p * t)
        sq_wh = (p + t) - (root + root)
        sq = jnp.where(is_wh, sq_wh, sq_xy)
        sq = jnp.where(is_coord & obj, sq, 0.0)

        if use_acc:
            # Sublane-group reduction: VPU adds only, no per-step XLU work.
            acc_ref[...] += jnp.sum(sq.reshape(tile // 8, 8, D), axis=0)

            @pl.when(step == last_step)
            def _():
                out_ref[0, 0] = LAMBDA_COORD * jnp.sum(acc_ref[...])
        else:
            # Single full-extent block whose row count is not a multiple of 8:
            # reduce directly (the XLU reduction happens exactly once anyway).
            out_ref[0, 0] = LAMBDA_COORD * jnp.sum(sq)

    return kernel


def yolo_coord_loss(preds, targets, *, tile_rows=None):
    """Pallas wrapper. preds/targets: (..., D) float with D = C + 5*B = 30."""
    assert preds.shape == targets.shape
    assert preds.shape[-1] == D

    rows = int(math.prod(preds.shape[:-1]))
    p2 = preds.reshape(rows, D)   # free reshape; keep input dtype (f32 or bf16)
    t2 = targets.reshape(rows, D)

    # Tile selection: multiple of 8 (or full extent), >= 4 pipelined blocks for
    # mid/large inputs, capped so double-buffered padded VMEM stays <= 32 MiB.
    if tile_rows is not None:
        tr = _round_up(int(tile_rows), 8)
        tile = rows if tr >= rows else tr
    elif rows <= _SINGLE_BLOCK_MAX_ROWS:
        tile = rows                                # one block == full extent
    else:
        tile = min(_round_up(-(-rows // 4), 8), _MAX_TILE_ROWS)
    num_tiles = -(-rows // tile)
    need_row_mask = (rows % tile) != 0

    kernel = _make_kernel(tile, num_tiles, rows, need_row_mask)

    out = pl.pallas_call(
        kernel,
        out_shape=jax.ShapeDtypeStruct((1, 1), jnp.float32),
        grid_spec=pltpu.PrefetchScalarGridSpec(
            num_scalar_prefetch=0,
            grid=(num_tiles,),
            in_specs=[
                pl.BlockSpec((tile, D), lambda i: (i, 0)),
                pl.BlockSpec((tile, D), lambda i: (i, 0)),
            ],
            out_specs=pl.BlockSpec(memory_space=pltpu.MemorySpace.SMEM),
            scratch_shapes=[pltpu.VMEM((8, D), jnp.float32)],
        ),
        compiler_params=pltpu.CompilerParams(
            dimension_semantics=("arbitrary",),
            vmem_limit_bytes=32 * 1024 * 1024,
        ),
    )(p2, t2)
    return out[0, 0]


def _reference_coord_loss(preds, targets):
    """NumPy reference mirroring the PyTorch code (mse reduction='sum')."""
    pn = np.asarray(preds, dtype=np.float64)
    tn = np.asarray(targets, dtype=np.float64)
    obj_mask = tn[..., 4] > 0
    box_pred = pn[obj_mask][..., : 5 * B].reshape(-1, B, 5).copy()
    box_tgt = tn[obj_mask][..., : 5 * B].reshape(-1, B, 5).copy()
    box_pred[..., 2:4] = np.sqrt(box_pred[..., 2:4])
    box_tgt[..., 2:4] = np.sqrt(box_tgt[..., 2:4])
    return LAMBDA_COORD * np.sum((box_pred[..., :4] - box_tgt[..., :4]) ** 2)


if __name__ == "__main__":
    key = jax.random.PRNGKey(0)
    k_pred, k_tgt, k_conf = jax.random.split(key, 3)

    N = 2  # batch
    # Predictions: nonnegative (so the reference's sqrt stays real on obj cells).
    preds = jax.random.uniform(k_pred, (N, S, S, D), jnp.float32,
                               minval=0.01, maxval=1.0)
    # Targets: nonnegative box fields; confidence (col 4) is 0 or positive.
    targets = jax.random.uniform(k_tgt, (N, S, S, D), jnp.float32,
                                 minval=0.01, maxval=1.0)
    has_obj = (jax.random.uniform(k_conf, (N, S, S)) < 0.3).astype(jnp.float32)
    targets = targets.at[..., 4].set(targets[..., 4] * has_obj)

    ref = _reference_coord_loss(preds, targets)
    RTOL, ATOL = 5e-4, 5e-4   # sqrt identity adds mild cancellation when p~=t

    # 1) Single-block path (rows = 98 fits in one full-extent block, no mask).
    loss = jax.block_until_ready(yolo_coord_loss(preds, targets))
    assert np.allclose(float(loss), ref, rtol=RTOL, atol=ATOL), (float(loss), ref)

    # 2) Multi-tile path: partial, row-masked last block + VMEM accumulator.
    loss_tiled = jax.block_until_ready(
        yolo_coord_loss(preds, targets, tile_rows=32))
    assert np.allclose(float(loss_tiled), ref, rtol=RTOL, atol=ATOL), (
        float(loss_tiled), ref)

    # 3) NaN guard: negative predicted w/h in a NO-object cell must leave the
    #    loss unchanged and finite (sqrt(p*t) NaN is discarded by the select).
    no_obj_cells = np.argwhere(np.asarray(has_obj) == 0.0)
    if no_obj_cells.size:
        n_i, i_i, j_i = (int(x) for x in no_obj_cells[0])
        preds_neg = preds.at[n_i, i_i, j_i, 2].set(-1.0)
        preds_neg = preds_neg.at[n_i, i_i, j_i, 3].set(-1.0)
        loss_neg = jax.block_until_ready(yolo_coord_loss(preds_neg, targets))
        assert np.isfinite(float(loss_neg)), float(loss_neg)
        assert np.allclose(float(loss_neg), ref, rtol=RTOL, atol=ATOL), (
            float(loss_neg), ref)
        loss_neg_tiled = jax.block_until_ready(
            yolo_coord_loss(preds_neg, targets, tile_rows=32))
        assert np.allclose(float(loss_neg_tiled), ref, rtol=RTOL, atol=ATOL), (
            float(loss_neg_tiled), ref)

    print("KERNEL_OK")
</pallas_src>

<mosaic_0001>
module attributes {stable_mosaic.version = 11 : i64} {
  func.func @kernel(%arg0: i32, %arg1: memref<98x30xf32, #tpu.memory_space<vmem>>, %arg2: memref<98x30xf32, #tpu.memory_space<vmem>>, %arg3: memref<1x1xf32, #tpu.memory_space<smem>>, %arg4: memref<8x30xf32, #tpu.memory_space<vmem>>) attributes {dimension_semantics = [#tpu.dimension_semantics<arbitrary>], iteration_bounds = array<i64: 1>, scalar_prefetch = 0 : i64, scratch_operands = 1 : i64, tpu.core_type = #tpu.core_type<tc>, window_params = [{transform_indices = @transform_0, window_bounds = array<i64: 98, 30>}, {transform_indices = @transform_1, window_bounds = array<i64: 98, 30>}, {transform_indices = @transform_2, window_bounds = array<i64: 1, 1>}]} {
    %c0 = arith.constant 0 : index
    %c0_0 = arith.constant 0 : index
    %0 = vector.load %arg1[%c0, %c0_0] : memref<98x30xf32, #tpu.memory_space<vmem>>, vector<98x30xf32>
    %c0_1 = arith.constant 0 : index
    %c0_2 = arith.constant 0 : index
    %1 = vector.load %arg2[%c0_1, %c0_2] : memref<98x30xf32, #tpu.memory_space<vmem>>, vector<98x30xf32>
    %2 = tpu.iota {dimensions = array<i32: 1>} : vector<1x30xi32>
    %c5_i32 = arith.constant 5 : i32
    %c0_i32 = arith.constant 0 : i32
    %3 = arith.cmpi eq, %c5_i32, %c0_i32 : i32
    %c1_i32 = arith.constant 1 : i32
    %4 = arith.select %3, %c1_i32, %c5_i32 : i32
    %5 = vector.broadcast %4 : i32 to vector<1x30xi32>
    %6 = arith.remsi %2, %5 : vector<1x30xi32>
    %c0_i32_3 = arith.constant 0 : i32
    %7 = vector.broadcast %c0_i32_3 : i32 to vector<1x30xi32>
    %8 = arith.cmpi ne, %6, %7 : vector<1x30xi32>
    %c0_i32_4 = arith.constant 0 : i32
    %9 = vector.broadcast %c0_i32_4 : i32 to vector<1x30xi32>
    %10 = arith.cmpi slt, %6, %9 : vector<1x30xi32>
    %c0_i32_5 = arith.constant 0 : i32
    %11 = arith.cmpi slt, %4, %c0_i32_5 : i32
    %12 = vector.broadcast %11 : i1 to vector<1x30xi1>
    %13 = vector.broadcast %12 : vector<1x30xi1> to vector<1x30xi1>
    %14 = arith.xori %10, %13 : vector<1x30xi1>
    %15 = arith.andi %14, %8 : vector<1x30xi1>
    %16 = vector.broadcast %4 : i32 to vector<1x30xi32>
    %17 = arith.addi %6, %16 : vector<1x30xi32>
    %18 = arith.select %15, %17, %6 : vector<1x30xi1>, vector<1x30xi32>
    %c10_i32 = arith.constant 10 : i32
    %19 = vector.broadcast %c10_i32 : i32 to vector<1x30xi32>
    %20 = arith.cmpi slt, %2, %19 : vector<1x30xi32>
    %c4_i32 = arith.constant 4 : i32
    %21 = vector.broadcast %c4_i32 : i32 to vector<1x30xi32>
    %22 = arith.cmpi slt, %18, %21 : vector<1x30xi32>
    %23 = arith.andi %20, %22 : vector<1x30xi1>
    %c2_i32 = arith.constant 2 : i32
    %24 = vector.broadcast %c2_i32 : i32 to vector<1x30xi32>
    %25 = arith.cmpi sge, %18, %24 : vector<1x30xi32>
    %26 = arith.andi %20, %25 : vector<1x30xi1>
    %c4_i32_6 = arith.constant 4 : i32
    %27 = vector.broadcast %c4_i32_6 : i32 to vector<1x30xi32>
    %28 = arith.cmpi slt, %18, %27 : vector<1x30xi32>
    %29 = arith.andi %26, %28 : vector<1x30xi1>
    %30 = vector.extract_strided_slice %1 {offsets = [0, 4], sizes = [98, 1], strides = [1, 1]} : vector<98x30xf32> to vector<98x1xf32>
    %cst = arith.constant 0.000000e+00 : f32
    %31 = vector.broadcast %cst : f32 to vector<98x1xf32>
    %32 = arith.cmpf ogt, %30, %31 : vector<98x1xf32>
    %33 = arith.subf %0, %1 : vector<98x30xf32>
    %34 = arith.mulf %33, %33 : vector<98x30xf32>
    %35 = arith.mulf %0, %1 : vector<98x30xf32>
    %36 = math.sqrt %35 : vector<98x30xf32>
    %37 = arith.addf %0, %1 : vector<98x30xf32>
    %38 = arith.addf %36, %36 : vector<98x30xf32>
    %39 = arith.subf %37, %38 : vector<98x30xf32>
    %40 = vector.shape_cast %29 : vector<1x30xi1> to vector<1x30xi1>
    %41 = vector.broadcast %40 : vector<1x30xi1> to vector<98x30xi1>
    %42 = arith.select %41, %39, %34 : vector<98x30xi1>, vector<98x30xf32>
    %43 = vector.broadcast %23 : vector<1x30xi1> to vector<98x30xi1>
    %44 = vector.broadcast %32 : vector<98x1xi1> to vector<98x30xi1>
    %45 = arith.andi %43, %44 : vector<98x30xi1>
    %cst_7 = arith.constant 0.000000e+00 : f32
    %46 = vector.broadcast %cst_7 : f32 to vector<98x30xf32>
    %47 = arith.select %45, %42, %46 : vector<98x30xi1>, vector<98x30xf32>
    %48 = vector.shape_cast %47 : vector<98x30xf32> to vector<1x98x30xf32>
    %cst_8 = arith.constant dense<0.000000e+00> : vector<1xf32>
    %49 = vector.multi_reduction <add>, %48, %cst_8 [1, 2] : vector<1x98x30xf32> to vector<1xf32>
    %50 = vector.shape_cast %49 : vector<1xf32> to vector<1x1x1xf32>
    %51 = vector.extract %50[0, 0, 0] : f32 from vector<1x1x1xf32>
    %cst_9 = arith.constant 5.000000e+00 : f32
    %52 = arith.mulf %cst_9, %51 : f32
    %c0_10 = arith.constant 0 : index
    %c0_11 = arith.constant 0 : index
    %53 = memref.load %arg3[%c0_10, %c0_11] : memref<1x1xf32, #tpu.memory_space<smem>>
    memref.store %52, %arg3[%c0_10, %c0_11] : memref<1x1xf32, #tpu.memory_space<smem>>
    return
  }
  func.func @transform_0(%arg0: i32) -> (i32, i32) {
    %c0_i32 = arith.constant 0 : i32
    %c0_i32_0 = arith.constant 0 : i32
    return %arg0, %c0_i32 : i32, i32
  }
  func.func @transform_1(%arg0: i32) -> (i32, i32) {
    %c0_i32 = arith.constant 0 : i32
    %c0_i32_0 = arith.constant 0 : i32
    return %arg0, %c0_i32 : i32, i32
  }
  func.func @transform_2(%arg0: i32) -> (i32, i32) {
    %c0_i32 = arith.constant 0 : i32
    %c0_i32_0 = arith.constant 0 : i32
    %c0_i32_1 = arith.constant 0 : i32
    return %c0_i32, %c0_i32_0 : i32, i32
  }
}

</mosaic_0001>

<llo_original>
// kernel: tpu_custom_call.1
$region0: #{tpu_custom_call.1}
  #allocation0 [shape = 'u32[]', space=smem, size = 0x4, offset = 0x4, fixed_abs, tag = 'smem constant byte address 0x4 - core index']
  #allocation1 [shape = 'u32[144,128]{1,0:T(1,128)}', space=vmem, size = 0x12000, scoped, tag = 'internal scratch']
  #allocation2 [shape = 'f32[8,30]{1,0:T(8,128)}', space=vmem, size = 0x1000, scoped, tag = 'scratch operand']
  %s0 = inlined_call_operand.vmem [shape: f32[98,30], index: 0, kind: input, shape index: {}]
  %s1 = inlined_call_operand.vmem [shape: f32[98,30], index: 1, kind: input, shape index: {}]
  %s2 = inlined_call_operand.hbm [shape: f32[1,1], index: 2, kind: output, shape index: {}]
  %s3 = sld [smem:[#allocation0]]
  $region18: #{tpu_custom_call.1} parent=0
    _
  %s5 = ssub.s32 1, %s3
  %s6 = scalar_select 0, %s5, %s3
  $region1: #{tpu_custom_call.1} parent=0
    #allocation3 [shape = 'u8[512]{0}', space=smem, size = 0x200, scoped, tag = 'output window, operand 0, single buffered']
    #allocation4 [shape = 's32[1]{0}', space=sflag, size = 0x4, scoped, tag = 'scoped memory for tpu_custom_call.1']
    %7 = vsyncpa [#allocation4], 0
    // Predicated region
    $region2: #{tpu_custom_call.1} parent=1 // pred_check
      _
    $region3: #{tpu_custom_call.1} parent=1 // pred_check_branch
      %9 = sbr.rel (0) target = $region5
    $region4: #{tpu_custom_call.1} parent=1 // pred_region
      _
    $region5: #{tpu_custom_call.1} parent=1 // pred_fallthru
      _
    // Predicated region
    $region6: #{tpu_custom_call.1} parent=1 // pred_check
      _
    $region7: #{tpu_custom_call.1} parent=1 // pred_check_branch
      %11 = sbr.rel (0) target = $region9
    $region8: #{tpu_custom_call.1} parent=1 // pred_region
      _
    $region9: #{tpu_custom_call.1} parent=1 // pred_fallthru
      _
    %v12 = vld [vmem:[%s0] sm:$0xff]
    %v13 = vld [vmem:[%s0 + $0x8] sm:$0xff]
    %v14 = vld [vmem:[%s0 + $0x10] sm:$0xff]
    %v15 = vld [vmem:[%s0 + $0x18] sm:$0xff]
    %v16 = vld [vmem:[%s0 + $0x20] sm:$0xff]
    %v17 = vld [vmem:[%s0 + $0x28] sm:$0xff]
    %v18 = vld [vmem:[%s0 + $0x30] sm:$0xff]
    %v19 = vld [vmem:[%s0 + $0x38] sm:$0xff]
    %v20 = vld [vmem:[%s0 + $0x40] sm:$0xff]
    %v21 = vld [vmem:[%s0 + $0x48] sm:$0xff]
    %v22 = vld [vmem:[%s0 + $0x50] sm:$0xff]
    %v23 = vld [vmem:[%s0 + $0x58] sm:$0xff]
    %v24 = vld [vmem:[%s0 + $0x60] sm:$0x3]
    %v25 = vld [vmem:[%s1] sm:$0xff]
    %v26 = vld [vmem:[%s1 + $0x8] sm:$0xff]
    %v27 = vld [vmem:[%s1 + $0x10] sm:$0xff]
    %v28 = vld [vmem:[%s1 + $0x18] sm:$0xff]
    %v29 = vld [vmem:[%s1 + $0x20] sm:$0xff]
    %v30 = vld [vmem:[%s1 + $0x28] sm:$0xff]
    %v31 = vld [vmem:[%s1 + $0x30] sm:$0xff]
    %v32 = vld [vmem:[%s1 + $0x38] sm:$0xff]
    %v33 = vld [vmem:[%s1 + $0x40] sm:$0xff]
    %v34 = vld [vmem:[%s1 + $0x48] sm:$0xff]
    %v35 = vld [vmem:[%s1 + $0x50] sm:$0xff]
    %v36 = vld [vmem:[%s1 + $0x58] sm:$0xff]
    %v37 = vld [vmem:[%s1 + $0x60] sm:$0x3]
    %v38 = vlaneseq
    %v39 = vand.u32 %v38, 127
    %vm40 = vcmp.lt.s32.totalorder %v39, 0
    %v41 = vsub.s32 0, %v39
    %v42 = vsel %vm40, %v41, %v39
    %v43 = vmul.u32.u64.compose %v42, 3435973837
    %v44 = vextract.low.u32 %v43
    %v45 = vextract.high.u32 %v43
    %v46 = vshrl.u32 %v45, 2
    %v47 = vmul.u32 %v46, 5
    %v48 = vsub.s32 %v42, %v47
    %v49 = vsub.s32 0, %v48
    %v50 = vsel %vm40, %v49, %v48
    %vm51 = vcmp.ne.s32.totalorder %v50, 0
    %vm52 = vcmp.lt.s32.totalorder %v50, 0
    %vm53 = vmand %vm52, %vm51
    %v54 = vadd.s32 %v50, 5
    %v55 = vsel %vm53, %v54, %v50
    %vm56 = vcmp.lt.s32.totalorder %v39, 10
    %vm57 = vcmp.lt.s32.totalorder %v55, 4
    %vm58 = vmand %vm56, %vm57
    %vm59 = vcmp.ge.s32.totalorder %v55, 2
    %vm60 = vmand %vm56, %vm59
    %vm61 = vmand %vm60, %vm57
    %vm62 = vcmp.gt.f32.partialorder %v25, 0.0
    %vm63 = vcmp.gt.f32.partialorder %v26, 0.0
    %vm64 = vcmp.gt.f32.partialorder %v27, 0.0
    %vm65 = vcmp.gt.f32.partialorder %v28, 0.0
    %vm66 = vcmp.gt.f32.partialorder %v29, 0.0
    %vm67 = vcmp.gt.f32.partialorder %v30, 0.0
    %vm68 = vcmp.gt.f32.partialorder %v31, 0.0
    %vm69 = vcmp.gt.f32.partialorder %v32, 0.0
    %vm70 = vcmp.gt.f32.partialorder %v33, 0.0
    %vm71 = vcmp.gt.f32.partialorder %v34, 0.0
    %vm72 = vcmp.gt.f32.partialorder %v35, 0.0
    %vm73 = vcmp.gt.f32.partialorder %v36, 0.0
    %vm74 = vcmp.gt.f32.partialorder %v37, 0.0
    %v75 = vsub.f32 %v12, %v25
    %v76 = vsub.f32 %v13, %v26
    %v77 = vsub.f32 %v14, %v27
    %v78 = vsub.f32 %v15, %v28
    %v79 = vsub.f32 %v16, %v29
    %v80 = vsub.f32 %v17, %v30
    %v81 = vsub.f32 %v18, %v31
    %v82 = vsub.f32 %v19, %v32
    %v83 = vsub.f32 %v20, %v33
    %v84 = vsub.f32 %v21, %v34
    %v85 = vsub.f32 %v22, %v35
    %v86 = vsub.f32 %v23, %v36
    %v87 = vsub.f32 %v24, %v37
    %v88 = vmul.f32 %v75, %v75
    %v89 = vmul.f32 %v76, %v76
    %v90 = vmul.f32 %v77, %v77
    %v91 = vmul.f32 %v78, %v78
    %v92 = vmul.f32 %v79, %v79
    %v93 = vmul.f32 %v80, %v80
    %v94 = vmul.f32 %v81, %v81
    %v95 = vmul.f32 %v82, %v82
    %v96 = vmul.f32 %v83, %v83
    %v97 = vmul.f32 %v84, %v84
    %v98 = vmul.f32 %v85, %v85
    %v99 = vmul.f32 %v86, %v86
    %v100 = vmul.f32 %v87, %v87
    %v101 = vmul.f32 %v12, %v25
    %v102 = vmul.f32 %v13, %v26
    %v103 = vmul.f32 %v14, %v27
    %v104 = vmul.f32 %v15, %v28
    %v105 = vmul.f32 %v16, %v29
    %v106 = vmul.f32 %v17, %v30
    %v107 = vmul.f32 %v18, %v31
    %v108 = vmul.f32 %v19, %v32
    %v109 = vmul.f32 %v20, %v33
    %v110 = vmul.f32 %v21, %v34
    %v111 = vmul.f32 %v22, %v35
    %v112 = vmul.f32 %v23, %v36
    %v113 = vmul.f32 %v24, %v37
    %v114 = vrsqrt.pop %v101
    %v115 = vmul.f32 %v101, %v114
    %vm116 = vcmp.eq.f32.partialorder %v101, inf
    %v117 = vsel %vm116, %v101, %v115
    %vm118 = vcmp.eq.f32.partialorder %v101, 0.0
    %v119 = vand.u32 %v101, 2147483648
    %v120 = vsel %vm118, %v119, %v117
    %v121 = vrsqrt.pop %v102
    %v122 = vmul.f32 %v102, %v121
    %vm123 = vcmp.eq.f32.partialorder %v102, inf
    %v124 = vsel %vm123, %v102, %v122
    %vm125 = vcmp.eq.f32.partialorder %v102, 0.0
    %v126 = vand.u32 %v102, 2147483648
    %v127 = vsel %vm125, %v126, %v124
    %v128 = vrsqrt.pop %v103
    %v129 = vmul.f32 %v103, %v128
    %vm130 = vcmp.eq.f32.partialorder %v103, inf
    %v131 = vsel %vm130, %v103, %v129
    %vm132 = vcmp.eq.f32.partialorder %v103, 0.0
    %v133 = vand.u32 %v103, 2147483648
    %v134 = vsel %vm132, %v133, %v131
    %v135 = vrsqrt.pop %v104
    %v136 = vmul.f32 %v104, %v135
    %vm137 = vcmp.eq.f32.partialorder %v104, inf
    %v138 = vsel %vm137, %v104, %v136
    %vm139 = vcmp.eq.f32.partialorder %v104, 0.0
    %v140 = vand.u32 %v104, 2147483648
    %v141 = vsel %vm139, %v140, %v138
    %v142 = vrsqrt.pop %v105
    %v143 = vmul.f32 %v105, %v142
    %vm144 = vcmp.eq.f32.partialorder %v105, inf
    %v145 = vsel %vm144, %v105, %v143
    %vm146 = vcmp.eq.f32.partialorder %v105, 0.0
    %v147 = vand.u32 %v105, 2147483648
    %v148 = vsel %vm146, %v147, %v145
    %v149 = vrsqrt.pop %v106
    %v150 = vmul.f32 %v106, %v149
    %vm151 = vcmp.eq.f32.partialorder %v106, inf
    %v152 = vsel %vm151, %v106, %v150
    %vm153 = vcmp.eq.f32.partialorder %v106, 0.0
    %v154 = vand.u32 %v106, 2147483648
    %v155 = vsel %vm153, %v154, %v152
    %v156 = vrsqrt.pop %v107
    %v157 = vmul.f32 %v107, %v156
    %vm158 = vcmp.eq.f32.partialorder %v107, inf
    %v159 = vsel %vm158, %v107, %v157
    %vm160 = vcmp.eq.f32.partialorder %v107, 0.0
    %v161 = vand.u32 %v107, 2147483648
    %v162 = vsel %vm160, %v161, %v159
    %v163 = vrsqrt.pop %v108
    %v164 = vmul.f32 %v108, %v163
    %vm165 = vcmp.eq.f32.partialorder %v108, inf
    %v166 = vsel %vm165, %v108, %v164
    %vm167 = vcmp.eq.f32.partialorder %v108, 0.0
    %v168 = vand.u32 %v108, 2147483648
    %v169 = vsel %vm167, %v168, %v166
    %v170 = vrsqrt.pop %v109
    %v171 = vmul.f32 %v109, %v170
    %vm172 = vcmp.eq.f32.partialorder %v109, inf
    %v173 = vsel %vm172, %v109, %v171
    %vm174 = vcmp.eq.f32.partialorder %v109, 0.0
    %v175 = vand.u32 %v109, 2147483648
    %v176 = vsel %vm174, %v175, %v173
    %v177 = vrsqrt.pop %v110
    %v178 = vmul.f32 %v110, %v177
    %vm179 = vcmp.eq.f32.partialorder %v110, inf
    %v180 = vsel %vm179, %v110, %v178
    %vm181 = vcmp.eq.f32.partialorder %v110, 0.0
    %v182 = vand.u32 %v110, 2147483648
    %v183 = vsel %vm181, %v182, %v180
    %v184 = vrsqrt.pop %v111
    %v185 = vmul.f32 %v111, %v184
    %vm186 = vcmp.eq.f32.partialorder %v111, inf
    %v187 = vsel %vm186, %v111, %v185
    %vm188 = vcmp.eq.f32.partialorder %v111, 0.0
    %v189 = vand.u32 %v111, 2147483648
    %v190 = vsel %vm188, %v189, %v187
    %v191 = vrsqrt.pop %v112
    %v192 = vmul.f32 %v112, %v191
    %vm193 = vcmp.eq.f32.partialorder %v112, inf
    %v194 = vsel %vm193, %v112, %v192
    %vm195 = vcmp.eq.f32.partialorder %v112, 0.0
    %v196 = vand.u32 %v112, 2147483648
    %v197 = vsel %vm195, %v196, %v194
    %v198 = vrsqrt.pop %v113
    %v199 = vmul.f32 %v113, %v198
    %vm200 = vcmp.eq.f32.partialorder %v113, inf
    %v201 = vsel %vm200, %v113, %v199
    %vm202 = vcmp.eq.f32.partialorder %v113, 0.0
    %v203 = vand.u32 %v113, 2147483648
    %v204 = vsel %vm202, %v203, %v201
    %v205 = vadd.f32 %v12, %v25
    %v206 = vadd.f32 %v13, %v26
    %v207 = vadd.f32 %v14, %v27
    %v208 = vadd.f32 %v15, %v28
    %v209 = vadd.f32 %v16, %v29
    %v210 = vadd.f32 %v17, %v30
    %v211 = vadd.f32 %v18, %v31
    %v212 = vadd.f32 %v19, %v32
    %v213 = vadd.f32 %v20, %v33
    %v214 = vadd.f32 %v21, %v34
    %v215 = vadd.f32 %v22, %v35
    %v216 = vadd.f32 %v23, %v36
    %v217 = vadd.f32 %v24, %v37
    %v218 = vadd.f32 %v120, %v120
    %v219 = vadd.f32 %v127, %v127
    %v220 = vadd.f32 %v134, %v134
    %v221 = vadd.f32 %v141, %v141
    %v222 = vadd.f32 %v148, %v148
    %v223 = vadd.f32 %v155, %v155
    %v224 = vadd.f32 %v162, %v162
    %v225 = vadd.f32 %v169, %v169
    %v226 = vadd.f32 %v176, %v176
    %v227 = vadd.f32 %v183, %v183
    %v228 = vadd.f32 %v190, %v190
    %v229 = vadd.f32 %v197, %v197
    %v230 = vadd.f32 %v204, %v204
    %v231 = vsub.f32 %v205, %v218
    %v232 = vsub.f32 %v206, %v219
    %v233 = vsub.f32 %v207, %v220
    %v234 = vsub.f32 %v208, %v221
    %v235 = vsub.f32 %v209, %v222
    %v236 = vsub.f32 %v210, %v223
    %v237 = vsub.f32 %v211, %v224
    %v238 = vsub.f32 %v212, %v225
    %v239 = vsub.f32 %v213, %v226
    %v240 = vsub.f32 %v214, %v227
    %v241 = vsub.f32 %v215, %v228
    %v242 = vsub.f32 %v216, %v229
    %v243 = vsub.f32 %v217, %v230
    %v244 = vsel %vm61, 1, 0
    %vm245 = vcmp.eq.s32.totalorder %v244, 1
    %v246 = vsel %vm245, %v231, %v88
    %v247 = vsel %vm245, %v232, %v89
    %v248 = vsel %vm245, %v233, %v90
    %v249 = vsel %vm245, %v234, %v91
    %v250 = vsel %vm245, %v235, %v92
    %v251 = vsel %vm245, %v236, %v93
    %v252 = vsel %vm245, %v237, %v94
    %v253 = vsel %vm245, %v238, %v95
    %v254 = vsel %vm245, %v239, %v96
    %v255 = vsel %vm245, %v240, %v97
    %v256 = vsel %vm245, %v241, %v98
    %v257 = vsel %vm245, %v242, %v99
    %v258 = vsel %vm245, %v243, %v100
    %v259 = vsel %vm58, 1, 0
    %vm260 = vcmp.eq.s32.totalorder %v259, 1
    %v261 = vsel %vm62, 1, 0
    %v262 = vsel %vm63, 1, 0
    %v263 = vsel %vm64, 1, 0
    %v264 = vsel %vm65, 1, 0
    %v265 = vsel %vm66, 1, 0
    %v266 = vsel %vm67, 1, 0
    %v267 = vsel %vm68, 1, 0
    %v268 = vsel %vm69, 1, 0
    %v269 = vsel %vm70, 1, 0
    %v270 = vsel %vm71, 1, 0
    %v271 = vsel %vm72, 1, 0
    %v272 = vsel %vm73, 1, 0
    %v273 = vsel %vm74, 1, 0
    %274 = vset.pattern.permute.xlu0 4
    %275 = vperm.xlu0 %274, %v261
    %v276 = vpop.permute.xlu0 %275
    %277 = vset.pattern.permute.xlu0 4
    %278 = vperm.xlu0 %277, %v262
    %v279 = vpop.permute.xlu0 %278
    %280 = vset.pattern.permute.xlu0 4
    %281 = vperm.xlu0 %280, %v263
    %v282 = vpop.permute.xlu0 %281
    %283 = vset.pattern.permute.xlu0 4
    %284 = vperm.xlu0 %283, %v264
    %v285 = vpop.permute.xlu0 %284
    %286 = vset.pattern.permute.xlu0 4
    %287 = vperm.xlu0 %286, %v265
    %v288 = vpop.permute.xlu0 %287
    %289 = vset.pattern.permute.xlu0 4
    %290 = vperm.xlu0 %289, %v266
    %v291 = vpop.permute.xlu0 %290
    %292 = vset.pattern.permute.xlu0 4
    %293 = vperm.xlu0 %292, %v267
    %v294 = vpop.permute.xlu0 %293
    %295 = vset.pattern.permute.xlu0 4
    %296 = vperm.xlu0 %295, %v268
    %v297 = vpop.permute.xlu0 %296
    %298 = vset.pattern.permute.xlu0 4
    %299 = vperm.xlu0 %298, %v269
    %v300 = vpop.permute.xlu0 %299
    %301 = vset.pattern.permute.xlu0 4
    %302 = vperm.xlu0 %301, %v270
    %v303 = vpop.permute.xlu0 %302
    %304 = vset.pattern.permute.xlu0 4
    %305 = vperm.xlu0 %304, %v271
    %v306 = vpop.permute.xlu0 %305
    %307 = vset.pattern.permute.xlu0 4
    %308 = vperm.xlu0 %307, %v272
    %v309 = vpop.permute.xlu0 %308
    %310 = vset.pattern.permute.xlu0 4
    %311 = vperm.xlu0 %310, %v273
    %v312 = vpop.permute.xlu0 %311
    %vm313 = vcmp.eq.s32.totalorder %v276, 1
    %vm314 = vcmp.eq.s32.totalorder %v279, 1
    %vm315 = vcmp.eq.s32.totalorder %v282, 1
    %vm316 = vcmp.eq.s32.totalorder %v285, 1
    %vm317 = vcmp.eq.s32.totalorder %v288, 1
    %vm318 = vcmp.eq.s32.totalorder %v291, 1
    %vm319 = vcmp.eq.s32.totalorder %v294, 1
    %vm320 = vcmp.eq.s32.totalorder %v297, 1
    %vm321 = vcmp.eq.s32.totalorder %v300, 1
    %vm322 = vcmp.eq.s32.totalorder %v303, 1
    %vm323 = vcmp.eq.s32.totalorder %v306, 1
    %vm324 = vcmp.eq.s32.totalorder %v309, 1
    %vm325 = vcmp.eq.s32.totalorder %v312, 1
    %vm326 = vmand %vm260, %vm313
    %vm327 = vmand %vm260, %vm314
    %vm328 = vmand %vm260, %vm315
    %vm329 = vmand %vm260, %vm316
    %vm330 = vmand %vm260, %vm317
    %vm331 = vmand %vm260, %vm318
    %vm332 = vmand %vm260, %vm319
    %vm333 = vmand %vm260, %vm320
    %vm334 = vmand %vm260, %vm321
    %vm335 = vmand %vm260, %vm322
    %vm336 = vmand %vm260, %vm323
    %vm337 = vmand %vm260, %vm324
    %vm338 = vmand %vm260, %vm325
    %v339 = vsel %vm326, %v246, 0.0
    %v340 = vsel %vm327, %v247, 0.0
    %v341 = vsel %vm328, %v248, 0.0
    %v342 = vsel %vm329, %v249, 0.0
    %v343 = vsel %vm330, %v250, 0.0
    %v344 = vsel %vm331, %v251, 0.0
    %v345 = vsel %vm332, %v252, 0.0
    %v346 = vsel %vm333, %v253, 0.0
    %v347 = vsel %vm334, %v254, 0.0
    %v348 = vsel %vm335, %v255, 0.0
    %v349 = vsel %vm336, %v256, 0.0
    %v350 = vsel %vm337, %v257, 0.0
    %v351 = vsel %vm338, %v258, 0.0
    %vm352 = vcmask 244736
    %v353 = vsel %vm352, %v339, 0.0
    %v354 = vsel %vm352, %v340, 0.0
    %v355 = vadd.f32 %v353, %v354
    %v356 = vsel %vm352, %v341, 0.0
    %v357 = vadd.f32 %v355, %v356
    %v358 = vsel %vm352, %v342, 0.0
    %v359 = vadd.f32 %v357, %v358
    %v360 = vsel %vm352, %v343, 0.0
    %v361 = vadd.f32 %v359, %v360
    %v362 = vsel %vm352, %v344, 0.0
    %v363 = vadd.f32 %v361, %v362
    %v364 = vsel %vm352, %v345, 0.0
    %v365 = vadd.f32 %v363, %v364
    %v366 = vsel %vm352, %v346, 0.0
    %v367 = vadd.f32 %v365, %v366
    %v368 = vsel %vm352, %v347, 0.0
    %v369 = vadd.f32 %v367, %v368
    %v370 = vsel %vm352, %v348, 0.0
    %v371 = vadd.f32 %v369, %v370
    %v372 = vsel %vm352, %v349, 0.0
    %v373 = vadd.f32 %v371, %v372
    %v374 = vsel %vm352, %v350, 0.0
    %v375 = vadd.f32 %v373, %v374
    %vm376 = vcmask 238592
    %v377 = vsel %vm376, %v351, 0.0
    %v378 = vadd.f32 %v375, %v377
    %379 = vadd.xlane.f32.xlu0 %v378
    %v380 = vpop.xlane.xlu0 %379
    %v381 = vrot.slane %v380, 4
    %v382 = vadd.f32 %v380, %v381
    %v383 = vrot.slane %v382, 2
    %v384 = vadd.f32 %v382, %v383
    %v385 = vrot.slane %v384, 1
    %v386 = vadd.f32 %v384, %v385
    %s387 = vtos %v386
    %s388 = smul.f32 %s387, 5.0
    %s389 = scalar_lea.smem [#allocation3], 0
    %390 = sst [smem:[%s389]] %s388
    // Predicated region
    $region10: #{tpu_custom_call.1} parent=1 // pred_check
      _
    $region11: #{tpu_custom_call.1} parent=1 // pred_check_branch
      %392 = sbr.rel (0) target = $region13
    $region12: #{tpu_custom_call.1} parent=1 // pred_region
      %s394 = ssub.s32 16, 16
      %395 = vsyncadd [#allocation4], %s394
      %398 = dma.smem_to_hbm [#allocation3], 16, %s2, [#allocation4]
    $region13: #{tpu_custom_call.1} parent=1 // pred_fallthru
      _
    // Predicated region
    $region14: #{tpu_custom_call.1} parent=1 // pred_check
      _
    $region15: #{tpu_custom_call.1} parent=1 // pred_check_branch
      %400 = sbr.rel (0) target = $region17
    $region16: #{tpu_custom_call.1} parent=1 // pred_region
      %401 = dma.done [#allocation4], 16
    $region17: #{tpu_custom_call.1} parent=1 // pred_fallthru
      _
    %402 = sfence
    %403 = vsyncpa [#allocation4], 1

</llo_original>
